<compile_context>
chip_gen: v7x
topology: tpu7x:2x2x1
jax: 0.10.0
libtpu: 0.0.40
codegen_flags: <defaults>
</compile_context>

<pallas_src>
import math

import jax
import jax.numpy as jnp
from jax.experimental import pallas as pl
from jax.experimental.pallas import tpu as pltpu

SIGMA_DATA = 0.5
SD2 = SIGMA_DATA * SIGMA_DATA
SQRT2 = math.sqrt(2.0)

LANE = 128
# (CH, tile) f32 hidden activation at 4096 lanes is ~2 MiB; with double-buffered
# (C, tile) in/out blocks the per-step footprint is ~4-5 MiB — safely inside the
# 16 MiB v5e scoped-VMEM default and v7x's 64 MiB physical VMEM.
MAX_HW_TILE = 4096


def _cdiv(a, b):
    return -(-a // b)


def _precond_kernel(x_ref,     # (C, HW_T)   net_dtype (bf16 default)
                    coef_ref,  # (8, 1)      f32: rows 0..2 = c_skip, c_out, c_in
                    emb_ref,   # (CH, 1)     f32: noise embedding column (this batch)
                    w1_ref,    # (CH, C)     net_dtype
                    w2_ref,    # (C, CH)     net_dtype
                    dx_ref):   # (C, HW_T)   f32 out
    c_skip = coef_ref[0:1, :]          # (1, 1) — broadcasts over sublanes & lanes
    c_out = coef_ref[1:2, :]
    c_in = coef_ref[2:3, :]

    x = x_ref[...]                     # (C, HW_T)

    # UNet stand-in: noise-conditioned pointwise MLP.
    # h = w1 @ (c_in * x) + emb  ==  c_in * (w1 @ x) + emb   (matmul is linear),
    # keeping the MXU inputs in bf16 and the scale on the f32 accumulator.
    # NOTE: K=C / M=C matmul shapes underutilize the MXU at the toy C=4; with
    # real EDM2 channel counts (>=128) these become full MXU tiles.
    h = jnp.dot(w1_ref[...], x, preferred_element_type=jnp.float32)   # (CH, HW_T) f32
    h = c_in * h + emb_ref[...]                                       # lane broadcast

    # SiLU with a single EUP transcendental: h*sigmoid(h) = hh + hh*tanh(hh).
    # TODO(synk): on v6e/v7x this could run in bf16 for 2x EUP rate; kept f32 so
    # the same code is optimal/correct on v5e (no bf16 VPU/EUP there).
    hh = 0.5 * h
    h = hh + hh * jnp.tanh(hh)

    fx = jnp.dot(w2_ref[...], h.astype(w2_ref.dtype),
                 preferred_element_type=jnp.float32)                  # (C, HW_T) f32

    # D_x = c_skip * x + c_out * F_x   (f32 combine, f32 output)
    dx_ref[...] = c_skip * x.astype(jnp.float32) + c_out * fx


def precond_wrapper_forward(x, sigma, params, class_labels=None,
                            force_fp32=False, return_logvar=False):
    """Forward of PrecondWrapper (== Precond forward, label_dim=0)."""
    if class_labels is not None:
        raise ValueError("label_dim == 0: class_labels must be None.")
    B, C, H, W = x.shape
    HW = H * W
    CH = params["w1"].shape[0]

    net_dtype = jnp.float32 if force_fp32 else jnp.bfloat16

    # --- balanced lane tiling (multiple of 128, no oversized last tile) ---
    hw0 = _cdiv(HW, LANE) * LANE
    num_hw = _cdiv(hw0, MAX_HW_TILE)
    if B == 1 and num_hw == 1 and hw0 >= 2 * LANE:
        num_hw = 2          # ensure >=2 "parallel" grid steps (v7x: 2 TensorCores)
    hw_tile = _cdiv(_cdiv(hw0, num_hw), LANE) * LANE
    hw_pad = hw_tile * num_hw

    # --- sigma-only math hoisted out of the kernel (per-batch scalars / column) ---
    sigma = jnp.broadcast_to(jnp.asarray(sigma, jnp.float32).reshape(-1), (B,))
    denom = sigma * sigma + SD2
    inv_sqrt = jax.lax.rsqrt(denom)
    c_skip = SD2 / denom
    c_out = sigma * SIGMA_DATA * inv_sqrt
    c_in = inv_sqrt
    coef = jnp.stack([c_skip, c_out, c_in], axis=-1)               # (B, 3)
    coef = jnp.pad(coef, ((0, 0), (0, 5))).reshape(B, 8, 1)        # (B, 8, 1)

    c_noise = jnp.log(sigma) * 0.25                                # (B,)
    eff = jnp.cos(c_noise[:, None] * params["ef"] + params["ep"]) * SQRT2   # (B, F)
    emb = jnp.einsum("bf,hf->bh", eff, params["we"],
                     precision=jax.lax.Precision.HIGHEST)          # (B, CH)
    emb = emb.reshape(B, CH, 1).astype(jnp.float32)

    # --- lane-dense activations: (B, C, HW_pad), spatial on lanes ---
    x_pack = x.astype(jnp.float32).reshape(B, C, HW)
    if hw_pad != HW:
        # TODO(synk): avoid this pad + the matching un-pad slice below (each is a
        # full HBM pass) by keeping H*W a multiple of 128 in the caller layout.
        x_pack = jnp.pad(x_pack, ((0, 0), (0, 0), (0, hw_pad - HW)))
    x_pack = x_pack.astype(net_dtype)
    w1 = params["w1"].astype(net_dtype)
    w2 = params["w2"].astype(net_dtype)

    grid_spec = pltpu.PrefetchScalarGridSpec(
        num_scalar_prefetch=0,
        grid=(B, num_hw),
        in_specs=[
            pl.BlockSpec((None, C, hw_tile), lambda b, j: (b, 0, j)),   # x block
            pl.BlockSpec((None, 8, 1), lambda b, j: (b, 0, 0)),         # c_skip/out/in
            pl.BlockSpec((None, CH, 1), lambda b, j: (b, 0, 0)),        # emb column
            pl.BlockSpec((CH, C), lambda b, j: (0, 0)),                 # w1
            pl.BlockSpec((C, CH), lambda b, j: (0, 0)),                 # w2
        ],
        out_specs=pl.BlockSpec((None, C, hw_tile), lambda b, j: (b, 0, j)),
    )

    dx = pl.pallas_call(
        _precond_kernel,
        out_shape=jax.ShapeDtypeStruct((B, C, hw_pad), jnp.float32),
        grid_spec=grid_spec,
        compiler_params=pltpu.CompilerParams(
            dimension_semantics=("parallel", "parallel")),
    )(x_pack, coef, emb, w1, w2)

    if hw_pad != HW:
        dx = dx[:, :, :HW]
    D_x = dx.reshape(B, C, H, W)

    if return_logvar:
        # Uncertainty head (sigma-only, ~B*F flops) stays in the wrapper:
        # logvar = logvar_linear(logvar_fourier(c_noise)).
        lff = jnp.cos(c_noise[:, None] * params["lf"] + params["lp"]) * SQRT2  # (B, F)
        logvar = jnp.sum(lff * params["wl"], axis=-1).reshape(B, 1, 1, 1)
        return D_x, logvar
    return D_x


def precond_reference(x, sigma, params):
    """Pure-JAX f32 reference of the same math (for correctness checking)."""
    B, C, H, W = x.shape
    x = x.astype(jnp.float32)
    sig = sigma.reshape(B, 1, 1, 1).astype(jnp.float32)
    sd = SIGMA_DATA
    c_skip = sd ** 2 / (sig ** 2 + sd ** 2)
    c_out = sig * sd / jnp.sqrt(sig ** 2 + sd ** 2)
    c_in = 1.0 / jnp.sqrt(sd ** 2 + sig ** 2)
    c_noise = jnp.log(sigma.reshape(-1)) / 4.0                          # (B,)

    x_in = (c_in * x).reshape(B, C, H * W)
    eff = jnp.cos(c_noise[:, None] * params["ef"] + params["ep"]) * SQRT2   # (B, F)
    emb = jnp.einsum("hf,bf->bh", params["we"], eff)                    # (B, CH)
    h = jnp.einsum("hc,bcn->bhn", params["w1"], x_in,
                   precision=jax.lax.Precision.HIGHEST) + emb[:, :, None]
    h = h * jax.nn.sigmoid(h)
    f_x = jnp.einsum("ch,bhn->bcn", params["w2"], h,
                     precision=jax.lax.Precision.HIGHEST)
    D_x = c_skip * x + c_out * f_x.reshape(B, C, H, W)

    lff = jnp.cos(c_noise[:, None] * params["lf"] + params["lp"]) * SQRT2   # (B, F)
    logvar = jnp.sum(lff * params["wl"], axis=-1).reshape(B, 1, 1, 1)
    return D_x, logvar


if __name__ == "__main__":
    B, C, H, W = 2, 4, 16, 16
    CH, F = 128, 128      # stand-in hidden width / Fourier channels

    key = jax.random.PRNGKey(0)
    ks = jax.random.split(key, 10)
    params = {
        "w1": jax.random.normal(ks[0], (CH, C), jnp.float32) / math.sqrt(C),
        "we": jax.random.normal(ks[1], (CH, F), jnp.float32) / math.sqrt(F),
        "w2": jax.random.normal(ks[2], (C, CH), jnp.float32) / math.sqrt(CH),
        "ef": 2.0 * math.pi * jax.random.normal(ks[3], (1, F), jnp.float32),
        "ep": 2.0 * math.pi * jax.random.uniform(ks[4], (1, F), jnp.float32),
        "lf": 2.0 * math.pi * jax.random.normal(ks[5], (1, F), jnp.float32),
        "lp": 2.0 * math.pi * jax.random.uniform(ks[6], (1, F), jnp.float32),
    }
    # EDM2 MPConv-style forced weight normalization + 1/sqrt(fan_in) for the logvar head.
    wl_raw = jax.random.normal(ks[7], (1, F), jnp.float32)
    wl_norm = wl_raw / (1e-4 + jnp.linalg.norm(wl_raw) / math.sqrt(F))
    params["wl"] = wl_norm / math.sqrt(F)

    x = jax.random.normal(ks[8], (B, C, H, W), jnp.float32)
    sigma = jnp.exp(jax.random.normal(ks[9], (B,), jnp.float32) * 1.2 - 0.4)

    D_x, logvar = precond_wrapper_forward(x, sigma, params, return_logvar=True)
    jax.block_until_ready((D_x, logvar))

    D_ref, lv_ref = precond_reference(x, sigma, params)
    assert D_x.shape == (B, C, H, W)
    assert logvar.shape == (B, 1, 1, 1)
    # Kernel default path uses bf16 HBM traffic / bf16 MXU inputs with f32
    # accumulation; the reference runs f32 with Precision.HIGHEST, hence 2e-2.
    # (force_fp32=True keeps the network path in f32 if tighter accuracy is needed.)
    assert jnp.allclose(D_x, D_ref, rtol=2e-2, atol=2e-2)
    assert jnp.allclose(logvar, lv_ref, rtol=1e-2, atol=1e-2)
    print("KERNEL_OK")
</pallas_src>

<mosaic_0001>
module attributes {stable_mosaic.version = 11 : i64} {
  func.func @_precond_kernel(%arg0: i32, %arg1: i32, %arg2: memref<1x4x256xbf16, #tpu.memory_space<vmem>>, %arg3: memref<1x8x1xf32, #tpu.memory_space<vmem>>, %arg4: memref<1x128x1xf32, #tpu.memory_space<vmem>>, %arg5: memref<128x4xbf16, #tpu.memory_space<vmem>>, %arg6: memref<4x128xbf16, #tpu.memory_space<vmem>>, %arg7: memref<1x4x256xf32, #tpu.memory_space<vmem>>) attributes {dimension_semantics = [#tpu.dimension_semantics<parallel>, #tpu.dimension_semantics<parallel>], iteration_bounds = array<i64: 2, 1>, scalar_prefetch = 0 : i64, scratch_operands = 0 : i64, tpu.core_type = #tpu.core_type<tc>, window_params = [{transform_indices = @transform_0, window_bounds = array<i64: 1, 4, 256>}, {transform_indices = @transform_1, window_bounds = array<i64: 1, 8, 1>}, {transform_indices = @transform_2, window_bounds = array<i64: 1, 128, 1>}, {pipeline_mode = #tpu.pipeline_mode<synchronous>, transform_indices = @transform_3, window_bounds = array<i64: 128, 4>}, {pipeline_mode = #tpu.pipeline_mode<synchronous>, transform_indices = @transform_4, window_bounds = array<i64: 4, 128>}, {transform_indices = @transform_5, window_bounds = array<i64: 1, 4, 256>}]} {
    %c0 = arith.constant 0 : index
    %c0_0 = arith.constant 0 : index
    %c0_1 = arith.constant 0 : index
    %0 = vector.load %arg3[%c0, %c0_0, %c0_1] : memref<1x8x1xf32, #tpu.memory_space<vmem>>, vector<1x1x1xf32>
    %1 = vector.shape_cast %0 : vector<1x1x1xf32> to vector<1x1xf32>
    %c0_2 = arith.constant 0 : index
    %c1 = arith.constant 1 : index
    %c0_3 = arith.constant 0 : index
    %2 = vector.load %arg3[%c0_2, %c1, %c0_3] : memref<1x8x1xf32, #tpu.memory_space<vmem>>, vector<1x1x1xf32>
    %3 = vector.shape_cast %2 : vector<1x1x1xf32> to vector<1x1xf32>
    %c0_4 = arith.constant 0 : index
    %c2 = arith.constant 2 : index
    %c0_5 = arith.constant 0 : index
    %4 = vector.load %arg3[%c0_4, %c2, %c0_5] : memref<1x8x1xf32, #tpu.memory_space<vmem>>, vector<1x1x1xf32>
    %5 = vector.shape_cast %4 : vector<1x1x1xf32> to vector<1x1xf32>
    %c0_6 = arith.constant 0 : index
    %c0_7 = arith.constant 0 : index
    %c0_8 = arith.constant 0 : index
    %6 = vector.load %arg2[%c0_6, %c0_7, %c0_8] : memref<1x4x256xbf16, #tpu.memory_space<vmem>>, vector<1x4x256xbf16>
    %7 = vector.shape_cast %6 : vector<1x4x256xbf16> to vector<4x256xbf16>
    %c0_9 = arith.constant 0 : index
    %c0_10 = arith.constant 0 : index
    %8 = vector.load %arg5[%c0_9, %c0_10] : memref<128x4xbf16, #tpu.memory_space<vmem>>, vector<128x4xbf16>
    %cst = arith.constant dense<0.000000e+00> : vector<128x256xf32>
    %9 = tpu.matmul %8, %7, %cst {dimension_numbers = #tpu.dot_dimension_numbers<[1], [0], [0], [1], [0, 0, 1, 1], [], []>} : vector<128x4xbf16>, vector<4x256xbf16>, vector<128x256xf32> -> vector<128x256xf32>
    %10 = vector.broadcast %5 : vector<1x1xf32> to vector<128x256xf32>
    %11 = arith.mulf %10, %9 : vector<128x256xf32>
    %c0_11 = arith.constant 0 : index
    %c0_12 = arith.constant 0 : index
    %c0_13 = arith.constant 0 : index
    %12 = vector.load %arg4[%c0_11, %c0_12, %c0_13] : memref<1x128x1xf32, #tpu.memory_space<vmem>>, vector<1x128x1xf32>
    %13 = vector.shape_cast %12 : vector<1x128x1xf32> to vector<128x1xf32>
    %14 = vector.broadcast %13 : vector<128x1xf32> to vector<128x256xf32>
    %15 = arith.addf %11, %14 : vector<128x256xf32>
    %cst_14 = arith.constant 5.000000e-01 : f32
    %16 = vector.broadcast %cst_14 : f32 to vector<128x256xf32>
    %17 = arith.mulf %16, %15 : vector<128x256xf32>
    %18 = math.tanh %17 : vector<128x256xf32>
    %19 = arith.mulf %17, %18 : vector<128x256xf32>
    %20 = arith.addf %17, %19 : vector<128x256xf32>
    %c0_15 = arith.constant 0 : index
    %c0_16 = arith.constant 0 : index
    %21 = vector.load %arg6[%c0_15, %c0_16] : memref<4x128xbf16, #tpu.memory_space<vmem>>, vector<4x128xbf16>
    %22 = arith.truncf %20 : vector<128x256xf32> to vector<128x256xbf16>
    %cst_17 = arith.constant dense<0.000000e+00> : vector<4x256xf32>
    %23 = tpu.matmul %21, %22, %cst_17 {dimension_numbers = #tpu.dot_dimension_numbers<[1], [0], [0], [1], [0, 0, 1, 1], [], []>} : vector<4x128xbf16>, vector<128x256xbf16>, vector<4x256xf32> -> vector<4x256xf32>
    %24 = arith.extf %7 : vector<4x256xbf16> to vector<4x256xf32>
    %25 = vector.broadcast %1 : vector<1x1xf32> to vector<4x256xf32>
    %26 = arith.mulf %25, %24 : vector<4x256xf32>
    %27 = vector.broadcast %3 : vector<1x1xf32> to vector<4x256xf32>
    %28 = arith.mulf %27, %23 : vector<4x256xf32>
    %29 = arith.addf %26, %28 : vector<4x256xf32>
    %c0_18 = arith.constant 0 : index
    %c0_19 = arith.constant 0 : index
    %c0_20 = arith.constant 0 : index
    %30 = vector.load %arg7[%c0_18, %c0_19, %c0_20] : memref<1x4x256xf32, #tpu.memory_space<vmem>>, vector<1x4x256xf32>
    %31 = vector.shape_cast %30 : vector<1x4x256xf32> to vector<4x256xf32>
    %32 = vector.shape_cast %29 : vector<4x256xf32> to vector<1x4x256xf32>
    tpu.vector_store %arg7[%c0_18, %c0_19, %c0_20], %32 {strides = array<i32>} : memref<1x4x256xf32, #tpu.memory_space<vmem>>, vector<1x4x256xf32>,
    return
  }
  func.func @transform_0(%arg0: i32, %arg1: i32) -> (i32, i32, i32) {
    %c0_i32 = arith.constant 0 : i32
    %c0_i32_0 = arith.constant 0 : i32
    return %arg0, %c0_i32, %arg1 : i32, i32, i32
  }
  func.func @transform_1(%arg0: i32, %arg1: i32) -> (i32, i32, i32) {
    %c0_i32 = arith.constant 0 : i32
    %c0_i32_0 = arith.constant 0 : i32
    %c0_i32_1 = arith.constant 0 : i32
    return %arg0, %c0_i32, %c0_i32_0 : i32, i32, i32
  }
  func.func @transform_2(%arg0: i32, %arg1: i32) -> (i32, i32, i32) {
    %c0_i32 = arith.constant 0 : i32
    %c0_i32_0 = arith.constant 0 : i32
    %c0_i32_1 = arith.constant 0 : i32
    return %arg0, %c0_i32, %c0_i32_0 : i32, i32, i32
  }
  func.func @transform_3(%arg0: i32, %arg1: i32) -> (i32, i32) {
    %c0_i32 = arith.constant 0 : i32
    %c0_i32_0 = arith.constant 0 : i32
    %c0_i32_1 = arith.constant 0 : i32
    return %c0_i32, %c0_i32_0 : i32, i32
  }
  func.func @transform_4(%arg0: i32, %arg1: i32) -> (i32, i32) {
    %c0_i32 = arith.constant 0 : i32
    %c0_i32_0 = arith.constant 0 : i32
    %c0_i32_1 = arith.constant 0 : i32
    return %c0_i32, %c0_i32_0 : i32, i32
  }
  func.func @transform_5(%arg0: i32, %arg1: i32) -> (i32, i32, i32) {
    %c0_i32 = arith.constant 0 : i32
    %c0_i32_0 = arith.constant 0 : i32
    return %arg0, %c0_i32, %arg1 : i32, i32, i32
  }
}

</mosaic_0001>

<llo_original>
// kernel: tpu_custom_call.1
$region0: #{tpu_custom_call.1}
  #allocation0 [shape = 'u32[]', space=smem, size = 0x4, offset = 0x4, fixed_abs, tag = 'smem constant byte address 0x4 - core index']
  #allocation1 [shape = 'u32[144,128]{1,0:T(1,128)}', space=vmem, size = 0x12000, scoped, tag = 'internal scratch']
  %s0 = inlined_call_operand.vmem [shape: bf16[2,4,256], index: 0, kind: input, shape index: {}]
  %s1 = inlined_call_operand.vmem [shape: f32[2,8,1], index: 1, kind: input, shape index: {}]
  %s2 = inlined_call_operand.vmem [shape: f32[2,128,1], index: 2, kind: input, shape index: {}]
  %s3 = inlined_call_operand.vmem [shape: bf16[128,4], index: 3, kind: input, shape index: {}]
  %s4 = inlined_call_operand.vmem [shape: bf16[4,128], index: 4, kind: input, shape index: {}]
  %s5 = inlined_call_operand.hbm [shape: f32[2,4,256], index: 5, kind: output, shape index: {}]
  %s6 = sld [smem:[#allocation0]]
  $region53: #{tpu_custom_call.1} parent=0
    _
  %s8 = ssub.s32 1, %s6
  %s9 = scalar_select 0, %s8, %s6
  $region1: #{tpu_custom_call.1} parent=0
    #allocation2 [shape = 'u8[8192]{0}', space=vmem, size = 0x2000, scoped, tag = 'output window, operand 0']
    #allocation3 [shape = 's32[2]{0}', space=sflag, size = 0x8, scoped, tag = 'scoped memory for tpu_custom_call.1']
    %10 = vsyncpa [#allocation3], 0
    %s11 = scalar_lea.sflag [#allocation3], 1
    %12 = vsyncpa %s11, 0
    loop: start=0, step=1, limit=4
    $region2: #{tpu_custom_call.1} parent=1 // loop_pre_header
      _
    $region3: #{tpu_custom_call.1} parent=1 // loop_header
      %s14 = sphi 0, %s18
      %p15 = scmp.ge.s32.totalorder %s14, 4
      %s21 = sphi 0, %s33
      %s22 = sphi 0, %s29
      %s23 = sphi 0, %s21
      %s24 = sphi 0, %s22
      %s25 = sphi 0, %s23
      %s26 = sphi 0, %s24
      %s38 = sphi 0, %s40
      %s41 = sphi 0, %s38
      %s42 = sphi 0, %s41
      %s58 = sphi 0, %s42
      %s64 = sphi 0, %s66
      %s67 = sphi 0, %s64
      %s68 = sphi 0, %s67
      %s84 = sphi 0, %s68
      %s90 = sphi 0, %s92
      %s93 = sphi 0, %s90
      %s94 = sphi 0, %s93
      %s110 = sphi 0, %s94
      %s114 = sphi 0, %s114
      %s116 = sphi 0, %s114
      %s117 = sphi 0, %s116
      %s131 = sphi 0, %s117
      %s135 = sphi 0, %s135
      %s137 = sphi 0, %s135
      %s138 = sphi 0, %s137
      %s152 = sphi 0, %s138
      %s160 = sphi 0, %s162
      %s163 = sphi 0, %s160
      %s164 = sphi 0, %s163
      %s180 = sphi 0, %s164
    $region4: #{tpu_custom_call.1} parent=1 // loop_header_branch
      %17 = sbr.rel (%p15) target = $region8
    $region5: #{tpu_custom_call.1} parent=1 // loop_body
      %s19 = ssub.s32 %s14, 1
      %s20 = ssub.s32 %s14, 2
      %s27 = sadd.s32 1, %s22
      %p28 = scmp.ge.s32.totalorder %s27, 1
      %s29 = scalar_select %p28, 0, %s27
      %s30 = sadd.s32 1, %s21
      %s31 = scalar_select %p28, %s30, %s21
      %p32 = scmp.ge.s32.totalorder %s31, 2
      %s33 = scalar_select %p32, 0, %s31
      %s34 = ssub.s32 %s21, %s33
      %s35 = ssub.s32 %s22, %s29
      %s36 = sor.u32 %s34, %s35
      %p37 = scmp.eq.s32.totalorder %s36, 0
      %s39 = sadd.s32 %s38, 1
      %s40 = scalar_select %p37, %s38, %s39
      %p43 = pneg %p37
      %p44 = scmp.eq.s32.totalorder %s14, 1
      %p45 = por %p43, %p44
      %p46 = scmp.ne.s32.totalorder %s38, %s41
      %p47 = scmp.eq.s32.totalorder %s14, 0
      %p48 = por %p46, %p47
      %p49 = scmp.ne.s32.totalorder %s38, %s41
      %p50 = scmp.eq.s32.totalorder %s19, 1
      %p51 = por %p49, %p50
      %p52 = scmp.ne.s32.totalorder %s41, %s42
      %p53 = scmp.eq.s32.totalorder %s19, 0
      %p54 = por %p52, %p53
      %p55 = scmp.ne.s32.totalorder %s41, %s42
      %p56 = scmp.eq.s32.totalorder %s20, 1
      %p57 = por %p55, %p56
      %p59 = scmp.ne.s32.totalorder %s42, %s58
      %p60 = scmp.eq.s32.totalorder %s20, 0
      %p61 = por %p59, %p60
      %s62 = ssub.s32 %s21, %s33
      %p63 = scmp.eq.s32.totalorder %s62, 0
      %s65 = sadd.s32 %s64, 1
      %s66 = scalar_select %p63, %s64, %s65
      %p69 = pneg %p63
      %p70 = scmp.eq.s32.totalorder %s14, 1
      %p71 = por %p69, %p70
      %p72 = scmp.ne.s32.totalorder %s64, %s67
      %p73 = scmp.eq.s32.totalorder %s14, 0
      %p74 = por %p72, %p73
      %p75 = scmp.ne.s32.totalorder %s64, %s67
      %p76 = scmp.eq.s32.totalorder %s19, 1
      %p77 = por %p75, %p76
      %p78 = scmp.ne.s32.totalorder %s67, %s68
      %p79 = scmp.eq.s32.totalorder %s19, 0
      %p80 = por %p78, %p79
      %p81 = scmp.ne.s32.totalorder %s67, %s68
      %p82 = scmp.eq.s32.totalorder %s20, 1
      %p83 = por %p81, %p82
      %p85 = scmp.ne.s32.totalorder %s68, %s84
      %p86 = scmp.eq.s32.totalorder %s20, 0
      %p87 = por %p85, %p86
      %s88 = ssub.s32 %s21, %s33
      %p89 = scmp.eq.s32.totalorder %s88, 0
      %s91 = sadd.s32 %s90, 1
      %s92 = scalar_select %p89, %s90, %s91
      %p95 = pneg %p89
      %p96 = scmp.eq.s32.totalorder %s14, 1
      %p97 = por %p95, %p96
      %p98 = scmp.ne.s32.totalorder %s90, %s93
      %p99 = scmp.eq.s32.totalorder %s14, 0
      %p100 = por %p98, %p99
      %p101 = scmp.ne.s32.totalorder %s90, %s93
      %p102 = scmp.eq.s32.totalorder %s19, 1
      %p103 = por %p101, %p102
      %p104 = scmp.ne.s32.totalorder %s93, %s94
      %p105 = scmp.eq.s32.totalorder %s19, 0
      %p106 = por %p104, %p105
      %p107 = scmp.ne.s32.totalorder %s93, %s94
      %p108 = scmp.eq.s32.totalorder %s20, 1
      %p109 = por %p107, %p108
      %p111 = scmp.ne.s32.totalorder %s94, %s110
      %p112 = scmp.eq.s32.totalorder %s20, 0
      %p113 = por %p111, %p112
      %s115 = sadd.s32 %s114, 1
      %p118 = scmp.eq.s32.totalorder %s14, 1
      %p119 = scmp.ne.s32.totalorder %s114, %s116
      %p120 = scmp.eq.s32.totalorder %s14, 0
      %p121 = por %p119, %p120
      %p122 = scmp.ne.s32.totalorder %s114, %s116
      %p123 = scmp.eq.s32.totalorder %s19, 1
      %p124 = por %p122, %p123
      %p125 = scmp.ne.s32.totalorder %s116, %s117
      %p126 = scmp.eq.s32.totalorder %s19, 0
      %p127 = por %p125, %p126
      %p128 = scmp.ne.s32.totalorder %s116, %s117
      %p129 = scmp.eq.s32.totalorder %s20, 1
      %p130 = por %p128, %p129
      %p132 = scmp.ne.s32.totalorder %s117, %s131
      %p133 = scmp.eq.s32.totalorder %s20, 0
      %p134 = por %p132, %p133
      %s136 = sadd.s32 %s135, 1
      %p139 = scmp.eq.s32.totalorder %s14, 1
      %p140 = scmp.ne.s32.totalorder %s135, %s137
      %p141 = scmp.eq.s32.totalorder %s14, 0
      %p142 = por %p140, %p141
      %p143 = scmp.ne.s32.totalorder %s135, %s137
      %p144 = scmp.eq.s32.totalorder %s19, 1
      %p145 = por %p143, %p144
      %p146 = scmp.ne.s32.totalorder %s137, %s138
      %p147 = scmp.eq.s32.totalorder %s19, 0
      %p148 = por %p146, %p147
      %p149 = scmp.ne.s32.totalorder %s137, %s138
      %p150 = scmp.eq.s32.totalorder %s20, 1
      %p151 = por %p149, %p150
      %p153 = scmp.ne.s32.totalorder %s138, %s152
      %p154 = scmp.eq.s32.totalorder %s20, 0
      %p155 = por %p153, %p154
      %s156 = ssub.s32 %s21, %s33
      %s157 = ssub.s32 %s22, %s29
      %s158 = sor.u32 %s156, %s157
      %p159 = scmp.eq.s32.totalorder %s158, 0
      %s161 = sadd.s32 %s160, 1
      %s162 = scalar_select %p159, %s160, %s161
      %p165 = pneg %p159
      %p166 = scmp.eq.s32.totalorder %s14, 1
      %p167 = por %p165, %p166
      %p168 = scmp.ne.s32.totalorder %s160, %s163
      %p169 = scmp.eq.s32.totalorder %s14, 0
      %p170 = por %p168, %p169
      %p171 = scmp.ne.s32.totalorder %s160, %s163
      %p172 = scmp.eq.s32.totalorder %s19, 1
      %p173 = por %p171, %p172
      %p174 = scmp.ne.s32.totalorder %s163, %s164
      %p175 = scmp.eq.s32.totalorder %s19, 0
      %p176 = por %p174, %p175
      %p177 = scmp.ne.s32.totalorder %s163, %s164
      %p178 = scmp.eq.s32.totalorder %s20, 1
      %p179 = por %p177, %p178
      %p181 = scmp.ne.s32.totalorder %s164, %s180
      %p182 = scmp.eq.s32.totalorder %s20, 0
      %p183 = por %p181, %p182
      %p184 = scmp.le.s32.totalorder 1, %s14
      %p185 = scmp.lt.s32.totalorder %s14, 3
      %p186 = pnand %p184, %p185
      %p187 = pneg %p186
      // Predicated region
      $region9: #{tpu_custom_call.1} parent=5 // pred_check
        _
      $region10: #{tpu_custom_call.1} parent=5 // pred_check_branch
        %189 = sbr.rel (%p186) target = $region12
      $region11: #{tpu_custom_call.1} parent=5 // pred_region
        %s190 = ssub.s32 %s14, 1
        // Predicated region
        $region13: #{tpu_custom_call.1} parent=11 // pred_check
          %p191 = pneg %p127
        $region14: #{tpu_custom_call.1} parent=11 // pred_check_branch
          %193 = sbr.rel (%p191) target = $region16
        $region15: #{tpu_custom_call.1} parent=11 // pred_region
          _
        $region16: #{tpu_custom_call.1} parent=11 // pred_fallthru
          _
        // Predicated region
        $region17: #{tpu_custom_call.1} parent=11 // pred_check
          %p194 = pneg %p148
        $region18: #{tpu_custom_call.1} parent=11 // pred_check_branch
          %196 = sbr.rel (%p194) target = $region20
        $region19: #{tpu_custom_call.1} parent=11 // pred_region
          _
        $region20: #{tpu_custom_call.1} parent=11 // pred_fallthru
          _
      $region12: #{tpu_custom_call.1} parent=5 // pred_fallthru
        _
      %p197 = scmp.lt.s32.totalorder %s14, 2
      // Predicated region
      $region21: #{tpu_custom_call.1} parent=5 // pred_check
        %p198 = pneg %p197
      $region22: #{tpu_custom_call.1} parent=5 // pred_check_branch
        %200 = sbr.rel (%p198) target = $region24
      $region23: #{tpu_custom_call.1} parent=5 // pred_region
        // Predicated region
        $region25: #{tpu_custom_call.1} parent=23 // pred_check
          %p201 = pneg %p48
        $region26: #{tpu_custom_call.1} parent=23 // pred_check_branch
          %203 = sbr.rel (%p201) target = $region28
        $region27: #{tpu_custom_call.1} parent=23 // pred_region
          %s204 = smul.u32 2, %s22
          %p205 = scmp.lt.s32.totalorder %s21, 1
          %s206 = scalar_select %p205, %s21, 1
          %p207 = scmp.lt.s32.totalorder %s204, 1
          %s208 = scalar_select %p207, %s204, 1
          %s209 = smul.addr %s206, 2
          %s210 = sadd.s32 %s208, %s209
          %s211 = smul.addr %s210, 2
          %s212 = scalar_lea.vmem %s0, %s211
          %s213 = smul.u32 2, %s22
        $region28: #{tpu_custom_call.1} parent=23 // pred_fallthru
          _
        // Predicated region
        $region29: #{tpu_custom_call.1} parent=23 // pred_check
          %p214 = pneg %p74
        $region30: #{tpu_custom_call.1} parent=23 // pred_check_branch
          %216 = sbr.rel (%p214) target = $region32
        $region31: #{tpu_custom_call.1} parent=23 // pred_region
          %p217 = scmp.lt.s32.totalorder %s21, 1
          %s218 = scalar_select %p217, %s21, 1
          %s219 = smul.addr %s218, 8
          %s220 = scalar_lea.vmem %s1, %s219
        $region32: #{tpu_custom_call.1} parent=23 // pred_fallthru
          _
        // Predicated region
        $region33: #{tpu_custom_call.1} parent=23 // pred_check
          %p221 = pneg %p100
        $region34: #{tpu_custom_call.1} parent=23 // pred_check_branch
          %223 = sbr.rel (%p221) target = $region36
        $region35: #{tpu_custom_call.1} parent=23 // pred_region
          %p224 = scmp.lt.s32.totalorder %s21, 1
          %s225 = scalar_select %p224, %s21, 1
          %s226 = smul.addr %s225, 16
          %s227 = smul.addr %s226, 8
          %s228 = scalar_lea.vmem %s2, %s227
        $region36: #{tpu_custom_call.1} parent=23 // pred_fallthru
          _
      $region24: #{tpu_custom_call.1} parent=5 // pred_fallthru
        _
      %p229 = scmp.le.s32.totalorder 1, %s14
      %p230 = scmp.lt.s32.totalorder %s14, 3
      %p231 = pnand %p229, %p230
      %p232 = pneg %p231
      // Predicated region
      $region37: #{tpu_custom_call.1} parent=5 // pred_check
        _
      $region38: #{tpu_custom_call.1} parent=5 // pred_check_branch
        %234 = sbr.rel (%p231) target = $region40
      $region39: #{tpu_custom_call.1} parent=5 // pred_region
        %s235 = ssub.s32 %s14, 1
        %s236 = smul.u32 2, %s24
        %p237 = scmp.lt.s32.totalorder %s23, 1
        %s238 = scalar_select %p237, %s23, 1
        %p239 = scmp.lt.s32.totalorder %s236, 1
        %s240 = scalar_select %p239, %s236, 1
        %s241 = smul.addr %s238, 2
        %s242 = sadd.s32 %s240, %s241
        %s243 = smul.addr %s242, 2
        %s244 = scalar_lea.vmem %s0, %s243
        %p245 = pneg %p54
        %p246 = pneg %p51
        %p247 = scmp.lt.s32.totalorder %s23, 1
        %s248 = scalar_select %p247, %s23, 1
        %s249 = smul.addr %s248, 8
        %s250 = scalar_lea.vmem %s1, %s249
        %p251 = pneg %p80
        %p252 = pneg %p77
        %p253 = scmp.lt.s32.totalorder %s23, 1
        %s254 = scalar_select %p253, %s23, 1
        %s255 = smul.addr %s254, 16
        %s256 = smul.addr %s255, 8
        %s257 = scalar_lea.vmem %s2, %s256
        %p258 = pneg %p106
        %p259 = pneg %p103
        %p260 = pneg %p127
        %p261 = pneg %p124
        %p262 = pneg %p148
        %p263 = pneg %p145
        %p264 = pneg %p176
        %p265 = pneg %p173
        %s266 = sand.u32 %s163, 1
        %s267 = scalar_lea.sflag [#allocation3], %s266
        %s268 = sand.u32 %s163, 1
        %s269 = smul.addr %s268, 8
        %s270 = scalar_lea.vmem [#allocation2], %s269
        %s271 = smul.u32 2, %s24
        %p272 = scmp.lt.s32.totalorder %s23, 1
        %s273 = scalar_select %p272, %s23, 1
        %p274 = scmp.lt.s32.totalorder %s271, 1
        %s275 = scalar_select %p274, %s271, 1
        %s276 = smul.addr %s273, 2
        %s277 = sadd.s32 %s275, %s276
        %s278 = smul.addr %s277, 2
        %s279 = scalar_lea.vmem %s0, %s278
        %s280 = smul.u32 2, %s24
        %p281 = scmp.lt.s32.totalorder %s23, 1
        %s282 = scalar_select %p281, %s23, 1
        %s283 = smul.addr %s282, 8
        %s284 = scalar_lea.vmem %s1, %s283
        %p285 = scmp.lt.s32.totalorder %s23, 1
        %s286 = scalar_select %p285, %s23, 1
        %s287 = smul.addr %s286, 16
        %s288 = smul.addr %s287, 8
        %s289 = scalar_lea.vmem %s2, %s288
        %s290 = smul.u32 2, %s24
        %v292 = vld [vmem:[%s284] sm:$0x1]
        %v293 = vld [vmem:[%s284 + $0x1] sm:$0x1]
        %v294 = vld [vmem:[%s284 + $0x2] sm:$0x1]
        %v295 = vld [vmem:[%s279] sm:$0xf]
        %v296 = vld [vmem:[%s3] sm:$0xf]
        %v297 = vld [vmem:[%s3 + $0x4] sm:$0xf]
        %v298 = vld [vmem:[%s3 + $0x8] sm:$0xf]
        %v299 = vld [vmem:[%s3 + $0xc] sm:$0xf]
        %v300 = vld [vmem:[%s3 + $0x10] sm:$0xf]
        %v301 = vld [vmem:[%s3 + $0x14] sm:$0xf]
        %v302 = vld [vmem:[%s3 + $0x18] sm:$0xf]
        %v303 = vld [vmem:[%s3 + $0x1c] sm:$0xf]
        %v304 = vld [vmem:[%s3 + $0x20] sm:$0xf]
        %v305 = vld [vmem:[%s3 + $0x24] sm:$0xf]
        %v306 = vld [vmem:[%s3 + $0x28] sm:$0xf]
        %v307 = vld [vmem:[%s3 + $0x2c] sm:$0xf]
        %v308 = vld [vmem:[%s3 + $0x30] sm:$0xf]
        %v309 = vld [vmem:[%s3 + $0x34] sm:$0xf]
        %v310 = vld [vmem:[%s3 + $0x38] sm:$0xf]
        %v311 = vld [vmem:[%s3 + $0x3c] sm:$0xf]
        %v328 = vunpack.c.l.b16 %v296
        %v329 = vunpack.c.l.b16 %v297
        %v330 = vunpack.c.l.b16 %v298
        %v331 = vunpack.c.l.b16 %v299
        %v332 = vunpack.c.l.b16 %v300
        %v333 = vunpack.c.l.b16 %v301
        %v334 = vunpack.c.l.b16 %v302
        %v335 = vunpack.c.l.b16 %v303
        %v336 = vunpack.c.l.b16 %v304
        %v337 = vunpack.c.l.b16 %v305
        %v338 = vunpack.c.l.b16 %v306
        %v339 = vunpack.c.l.b16 %v307
        %v340 = vunpack.c.l.b16 %v308
        %v341 = vunpack.c.l.b16 %v309
        %v342 = vunpack.c.l.b16 %v310
        %v343 = vunpack.c.l.b16 %v311
        %v344 = vpack.c.b16 %v329, %v328
        %v345 = vpack.c.b16 %v331, %v330
        %v346 = vpack.c.b16 %v333, %v332
        %v347 = vpack.c.b16 %v335, %v334
        %v348 = vpack.c.b16 %v337, %v336
        %v349 = vpack.c.b16 %v339, %v338
        %v350 = vpack.c.b16 %v341, %v340
        %v351 = vpack.c.b16 %v343, %v342
        %v354 = vunpack.c.l.s4 1983009808
        %v355 = vunpack.c.0.s8 %v354
        %v356 = vlaneseq
        %v357 = vshrl.u32 %v356, 7
        %v358 = vsub.s32 %v355, %v357
        %v359 = vrot.slane %v295, %v358
        %v360 = vcombine.high %v359, %v359
        %vm361 = vcmask 31744
        %v363 = vsel %vm361, %v344, 0
        %v366 = vsel %vm361, %v345, 0
        %v369 = vsel %vm361, %v346, 0
        %v372 = vsel %vm361, %v347, 0
        %v375 = vsel %vm361, %v348, 0
        %v378 = vsel %vm361, %v349, 0
        %v381 = vsel %vm361, %v350, 0
        %v384 = vsel %vm361, %v351, 0
        %vm386 = vcmask 1041408
        %v388 = vsel %vm386, %v359, 0
        %v391 = vsel %vm386, %v360, 0
        %393 = vmatprep.subr.bf16.mxu0 %v391
        %394 = vmatpush1.bf16.msra.mxu0 %v388
        %395 = vmatprep.subr.bf16.mxu0 0
        %396 = vmatpush1.bf16.msra.mxu0 0
        %397 = vmatprep.subr.bf16.mxu0 0
        %398 = vmatpush1.bf16.msra.mxu0 0
        %399 = vmatprep.subr.bf16.mxu0 0
        %400 = vmatpush1.bf16.msra.mxu0 0
        %401 = vmatprep.subr.bf16.mxu0 0
        %402 = vmatpush1.bf16.msra.mxu0 0
        %403 = vmatprep.subr.bf16.mxu0 0
        %404 = vmatpush1.bf16.msra.mxu0 0
        %405 = vmatprep.subr.bf16.mxu0 0
        %406 = vmatpush1.bf16.msra.mxu0 0
        %407 = vmatprep.subr.bf16.mxu0 0
        %408 = vmatpush1.bf16.msra.mxu0 0
        %409 = vmatprep.subr.bf16.mxu0 0
        %410 = vmatpush1.bf16.msra.mxu0 0
        %411 = vmatprep.subr.bf16.mxu0 0
        %412 = vmatpush1.bf16.msra.mxu0 0
        %413 = vmatprep.subr.bf16.mxu0 0
        %414 = vmatpush1.bf16.msra.mxu0 0
        %415 = vmatprep.subr.bf16.mxu0 0
        %416 = vmatpush1.bf16.msra.mxu0 0
        %417 = vmatprep.subr.bf16.mxu0 0
        %418 = vmatpush1.bf16.msra.mxu0 0
        %419 = vmatprep.subr.bf16.mxu0 0
        %420 = vmatpush1.bf16.msra.mxu0 0
        %421 = vmatprep.subr.bf16.mxu0 0
        %422 = vmatpush1.bf16.msra.mxu0 0
        %423 = vmatprep.subr.bf16.mxu0 0
        %424 = vmatpush1.bf16.msra.mxu0 0
        %425 = vmatprep.mubr.bf16.mxu0 0
        %426 = vmatmul.mubr.bf16.gmra.mrb[0].mxu0 %v363
        %v427 = vpop.f32.mrb[0].mxu0
        %v428 = vadd.f32 0.0, %v427
        %v429 = vpop.f32.mrb[0].mxu0
        %v430 = vadd.f32 0.0, %v429
        %v431 = vpop.f32.mrb[0].mxu0
        %v432 = vadd.f32 0.0, %v431
        %v433 = vpop.f32.mrb[0].mxu0
        %v434 = vadd.f32 0.0, %v433
        %435 = vmatprep.mubr.bf16.mxu0 0
        %436 = vmatmul.mubr.bf16.gmra.mrb[0].mxu0 %v366
        %v437 = vpop.f32.mrb[0].mxu0
        %v438 = vadd.f32 0.0, %v437
        %v439 = vpop.f32.mrb[0].mxu0
        %v440 = vadd.f32 0.0, %v439
        %v441 = vpop.f32.mrb[0].mxu0
        %v442 = vadd.f32 0.0, %v441
        %v443 = vpop.f32.mrb[0].mxu0
        %v444 = vadd.f32 0.0, %v443
        %445 = vmatprep.mubr.bf16.mxu0 0
        %446 = vmatmul.mubr.bf16.gmra.mrb[0].mxu0 %v369
        %v447 = vpop.f32.mrb[0].mxu0
        %v448 = vadd.f32 0.0, %v447
        %v449 = vpop.f32.mrb[0].mxu0
        %v450 = vadd.f32 0.0, %v449
        %v451 = vpop.f32.mrb[0].mxu0
        %v452 = vadd.f32 0.0, %v451
        %v453 = vpop.f32.mrb[0].mxu0
        %v454 = vadd.f32 0.0, %v453
        %455 = vmatprep.mubr.bf16.mxu0 0
        %456 = vmatmul.mubr.bf16.gmra.mrb[0].mxu0 %v372
        %v457 = vpop.f32.mrb[0].mxu0
        %v458 = vadd.f32 0.0, %v457
        %v459 = vpop.f32.mrb[0].mxu0
        %v460 = vadd.f32 0.0, %v459
        %v461 = vpop.f32.mrb[0].mxu0
        %v462 = vadd.f32 0.0, %v461
        %v463 = vpop.f32.mrb[0].mxu0
        %v464 = vadd.f32 0.0, %v463
        %465 = vmatprep.mubr.bf16.mxu0 0
        %466 = vmatmul.mubr.bf16.gmra.mrb[0].mxu0 %v375
        %v467 = vpop.f32.mrb[0].mxu0
        %v468 = vadd.f32 0.0, %v467
        %v469 = vpop.f32.mrb[0].mxu0
        %v470 = vadd.f32 0.0, %v469
        %v471 = vpop.f32.mrb[0].mxu0
        %v472 = vadd.f32 0.0, %v471
        %v473 = vpop.f32.mrb[0].mxu0
        %v474 = vadd.f32 0.0, %v473
        %475 = vmatprep.mubr.bf16.mxu0 0
        %476 = vmatmul.mubr.bf16.gmra.mrb[0].mxu0 %v378
        %v477 = vpop.f32.mrb[0].mxu0
        %v478 = vadd.f32 0.0, %v477
        %v479 = vpop.f32.mrb[0].mxu0
        %v480 = vadd.f32 0.0, %v479
        %v481 = vpop.f32.mrb[0].mxu0
        %v482 = vadd.f32 0.0, %v481
        %v483 = vpop.f32.mrb[0].mxu0
        %v484 = vadd.f32 0.0, %v483
        %485 = vmatprep.mubr.bf16.mxu0 0
        %486 = vmatmul.mubr.bf16.gmra.mrb[0].mxu0 %v381
        %v487 = vpop.f32.mrb[0].mxu0
        %v488 = vadd.f32 0.0, %v487
        %v489 = vpop.f32.mrb[0].mxu0
        %v490 = vadd.f32 0.0, %v489
        %v491 = vpop.f32.mrb[0].mxu0
        %v492 = vadd.f32 0.0, %v491
        %v493 = vpop.f32.mrb[0].mxu0
        %v494 = vadd.f32 0.0, %v493
        %495 = vmatprep.mubr.bf16.mxu0 0
        %496 = vmatmul.mubr.bf16.gmra.mrb[0].mxu0 %v384
        %v497 = vpop.f32.mrb[0].mxu0
        %v498 = vadd.f32 0.0, %v497
        %v499 = vpop.f32.mrb[0].mxu0
        %v500 = vadd.f32 0.0, %v499
        %v501 = vpop.f32.mrb[0].mxu0
        %v502 = vadd.f32 0.0, %v501
        %v503 = vpop.f32.mrb[0].mxu0
        %v504 = vadd.f32 0.0, %v503
        %505 = vdwg.mxu0
        %s507 = vtos %v294
        %v508 = vstv %s507
        %v510 = vmul.f32 %v508, %v428
        %v511 = vmul.f32 %v508, %v430
        %v512 = vmul.f32 %v508, %v432
        %v513 = vmul.f32 %v508, %v434
        %v514 = vmul.f32 %v508, %v438
        %v515 = vmul.f32 %v508, %v440
        %v516 = vmul.f32 %v508, %v442
        %v517 = vmul.f32 %v508, %v444
        %v518 = vmul.f32 %v508, %v448
        %v519 = vmul.f32 %v508, %v450
        %v520 = vmul.f32 %v508, %v452
        %v521 = vmul.f32 %v508, %v454
        %v522 = vmul.f32 %v508, %v458
        %v523 = vmul.f32 %v508, %v460
        %v524 = vmul.f32 %v508, %v462
        %v525 = vmul.f32 %v508, %v464
        %v526 = vmul.f32 %v508, %v468
        %v527 = vmul.f32 %v508, %v470
        %v528 = vmul.f32 %v508, %v472
        %v529 = vmul.f32 %v508, %v474
        %v530 = vmul.f32 %v508, %v478
        %v531 = vmul.f32 %v508, %v480
        %v532 = vmul.f32 %v508, %v482
        %v533 = vmul.f32 %v508, %v484
        %v534 = vmul.f32 %v508, %v488
        %v535 = vmul.f32 %v508, %v490
        %v536 = vmul.f32 %v508, %v492
        %v537 = vmul.f32 %v508, %v494
        %v538 = vmul.f32 %v508, %v498
        %v539 = vmul.f32 %v508, %v500
        %v540 = vmul.f32 %v508, %v502
        %v541 = vmul.f32 %v508, %v504
        %v542 = vld [vmem:[%s289] sm:$0xff]
        %v543 = vld [vmem:[%s289 + $0x8] sm:$0xff]
        %v544 = vld [vmem:[%s289 + $0x10] sm:$0xff]
        %v545 = vld [vmem:[%s289 + $0x18] sm:$0xff]
        %v546 = vld [vmem:[%s289 + $0x20] sm:$0xff]
        %v547 = vld [vmem:[%s289 + $0x28] sm:$0xff]
        %v548 = vld [vmem:[%s289 + $0x30] sm:$0xff]
        %v549 = vld [vmem:[%s289 + $0x38] sm:$0xff]
        %v550 = vld [vmem:[%s289 + $0x40] sm:$0xff]
        %v551 = vld [vmem:[%s289 + $0x48] sm:$0xff]
        %v552 = vld [vmem:[%s289 + $0x50] sm:$0xff]
        %v553 = vld [vmem:[%s289 + $0x58] sm:$0xff]
        %v554 = vld [vmem:[%s289 + $0x60] sm:$0xff]
        %v555 = vld [vmem:[%s289 + $0x68] sm:$0xff]
        %v556 = vld [vmem:[%s289 + $0x70] sm:$0xff]
        %v557 = vld [vmem:[%s289 + $0x78] sm:$0xff]
        %559 = vset.pattern.permute.xlu0 0
        %560 = vperm.xlu0 %559, %v542
        %v561 = vpop.permute.xlu0 %560
        %564 = vset.pattern.permute.xlu0 0
        %565 = vperm.xlu0 %564, %v543
        %v566 = vpop.permute.xlu0 %565
        %569 = vset.pattern.permute.xlu0 0
        %570 = vperm.xlu0 %569, %v544
        %v571 = vpop.permute.xlu0 %570
        %574 = vset.pattern.permute.xlu0 0
        %575 = vperm.xlu0 %574, %v545
        %v576 = vpop.permute.xlu0 %575
        %579 = vset.pattern.permute.xlu0 0
        %580 = vperm.xlu0 %579, %v546
        %v581 = vpop.permute.xlu0 %580
        %584 = vset.pattern.permute.xlu0 0
        %585 = vperm.xlu0 %584, %v547
        %v586 = vpop.permute.xlu0 %585
        %589 = vset.pattern.permute.xlu0 0
        %590 = vperm.xlu0 %589, %v548
        %v591 = vpop.permute.xlu0 %590
        %594 = vset.pattern.permute.xlu0 0
        %595 = vperm.xlu0 %594, %v549
        %v596 = vpop.permute.xlu0 %595
        %599 = vset.pattern.permute.xlu0 0
        %600 = vperm.xlu0 %599, %v550
        %v601 = vpop.permute.xlu0 %600
        %604 = vset.pattern.permute.xlu0 0
        %605 = vperm.xlu0 %604, %v551
        %v606 = vpop.permute.xlu0 %605
        %609 = vset.pattern.permute.xlu0 0
        %610 = vperm.xlu0 %609, %v552
        %v611 = vpop.permute.xlu0 %610
        %614 = vset.pattern.permute.xlu0 0
        %615 = vperm.xlu0 %614, %v553
        %v616 = vpop.permute.xlu0 %615
        %619 = vset.pattern.permute.xlu0 0
        %620 = vperm.xlu0 %619, %v554
        %v621 = vpop.permute.xlu0 %620
        %624 = vset.pattern.permute.xlu0 0
        %625 = vperm.xlu0 %624, %v555
        %v626 = vpop.permute.xlu0 %625
        %629 = vset.pattern.permute.xlu0 0
        %630 = vperm.xlu0 %629, %v556
        %v631 = vpop.permute.xlu0 %630
        %634 = vset.pattern.permute.xlu0 0
        %635 = vperm.xlu0 %634, %v557
        %v636 = vpop.permute.xlu0 %635
        %v638 = vadd.f32 %v510, %v561
        %v639 = vadd.f32 %v511, %v561
        %v640 = vadd.f32 %v512, %v566
        %v641 = vadd.f32 %v513, %v566
        %v642 = vadd.f32 %v514, %v571
        %v643 = vadd.f32 %v515, %v571
        %v644 = vadd.f32 %v516, %v576
        %v645 = vadd.f32 %v517, %v576
        %v646 = vadd.f32 %v518, %v581
        %v647 = vadd.f32 %v519, %v581
        %v648 = vadd.f32 %v520, %v586
        %v649 = vadd.f32 %v521, %v586
        %v650 = vadd.f32 %v522, %v591
        %v651 = vadd.f32 %v523, %v591
        %v652 = vadd.f32 %v524, %v596
        %v653 = vadd.f32 %v525, %v596
        %v654 = vadd.f32 %v526, %v601
        %v655 = vadd.f32 %v527, %v601
        %v656 = vadd.f32 %v528, %v606
        %v657 = vadd.f32 %v529, %v606
        %v658 = vadd.f32 %v530, %v611
        %v659 = vadd.f32 %v531, %v611
        %v660 = vadd.f32 %v532, %v616
        %v661 = vadd.f32 %v533, %v616
        %v662 = vadd.f32 %v534, %v621
        %v663 = vadd.f32 %v535, %v621
        %v664 = vadd.f32 %v536, %v626
        %v665 = vadd.f32 %v537, %v626
        %v666 = vadd.f32 %v538, %v631
        %v667 = vadd.f32 %v539, %v631
        %v668 = vadd.f32 %v540, %v636
        %v669 = vadd.f32 %v541, %v636
        %v670 = vmul.f32 %v638, 0.5
        %v671 = vmul.f32 %v639, 0.5
        %v672 = vmul.f32 %v640, 0.5
        %v673 = vmul.f32 %v641, 0.5
        %v674 = vmul.f32 %v642, 0.5
        %v675 = vmul.f32 %v643, 0.5
        %v676 = vmul.f32 %v644, 0.5
        %v677 = vmul.f32 %v645, 0.5
        %v678 = vmul.f32 %v646, 0.5
        %v679 = vmul.f32 %v647, 0.5
        %v680 = vmul.f32 %v648, 0.5
        %v681 = vmul.f32 %v649, 0.5
        %v682 = vmul.f32 %v650, 0.5
        %v683 = vmul.f32 %v651, 0.5
        %v684 = vmul.f32 %v652, 0.5
        %v685 = vmul.f32 %v653, 0.5
        %v686 = vmul.f32 %v654, 0.5
        %v687 = vmul.f32 %v655, 0.5
        %v688 = vmul.f32 %v656, 0.5
        %v689 = vmul.f32 %v657, 0.5
        %v690 = vmul.f32 %v658, 0.5
        %v691 = vmul.f32 %v659, 0.5
        %v692 = vmul.f32 %v660, 0.5
        %v693 = vmul.f32 %v661, 0.5
        %v694 = vmul.f32 %v662, 0.5
        %v695 = vmul.f32 %v663, 0.5
        %v696 = vmul.f32 %v664, 0.5
        %v697 = vmul.f32 %v665, 0.5
        %v698 = vmul.f32 %v666, 0.5
        %v699 = vmul.f32 %v667, 0.5
        %v700 = vmul.f32 %v668, 0.5
        %v701 = vmul.f32 %v669, 0.5
        %v702 = vtanh.pop %v670
        %v703 = vtanh.pop %v671
        %v704 = vtanh.pop %v672
        %v705 = vtanh.pop %v673
        %v706 = vtanh.pop %v674
        %v707 = vtanh.pop %v675
        %v708 = vtanh.pop %v676
        %v709 = vtanh.pop %v677
        %v710 = vtanh.pop %v678
        %v711 = vtanh.pop %v679
        %v712 = vtanh.pop %v680
        %v713 = vtanh.pop %v681
        %v714 = vtanh.pop %v682
        %v715 = vtanh.pop %v683
        %v716 = vtanh.pop %v684
        %v717 = vtanh.pop %v685
        %v718 = vtanh.pop %v686
        %v719 = vtanh.pop %v687
        %v720 = vtanh.pop %v688
        %v721 = vtanh.pop %v689
        %v722 = vtanh.pop %v690
        %v723 = vtanh.pop %v691
        %v724 = vtanh.pop %v692
        %v725 = vtanh.pop %v693
        %v726 = vtanh.pop %v694
        %v727 = vtanh.pop %v695
        %v728 = vtanh.pop %v696
        %v729 = vtanh.pop %v697
        %v730 = vtanh.pop %v698
        %v731 = vtanh.pop %v699
        %v732 = vtanh.pop %v700
        %v733 = vtanh.pop %v701
        %v734 = vmul.f32 %v670, %v702
        %v735 = vmul.f32 %v671, %v703
        %v736 = vmul.f32 %v672, %v704
        %v737 = vmul.f32 %v673, %v705
        %v738 = vmul.f32 %v674, %v706
        %v739 = vmul.f32 %v675, %v707
        %v740 = vmul.f32 %v676, %v708
        %v741 = vmul.f32 %v677, %v709
        %v742 = vmul.f32 %v678, %v710
        %v743 = vmul.f32 %v679, %v711
        %v744 = vmul.f32 %v680, %v712
        %v745 = vmul.f32 %v681, %v713
        %v746 = vmul.f32 %v682, %v714
        %v747 = vmul.f32 %v683, %v715
        %v748 = vmul.f32 %v684, %v716
        %v749 = vmul.f32 %v685, %v717
        %v750 = vmul.f32 %v686, %v718
        %v751 = vmul.f32 %v687, %v719
        %v752 = vmul.f32 %v688, %v720
        %v753 = vmul.f32 %v689, %v721
        %v754 = vmul.f32 %v690, %v722
        %v755 = vmul.f32 %v691, %v723
        %v756 = vmul.f32 %v692, %v724
        %v757 = vmul.f32 %v693, %v725
        %v758 = vmul.f32 %v694, %v726
        %v759 = vmul.f32 %v695, %v727
        %v760 = vmul.f32 %v696, %v728
        %v761 = vmul.f32 %v697, %v729
        %v762 = vmul.f32 %v698, %v730
        %v763 = vmul.f32 %v699, %v731
        %v764 = vmul.f32 %v700, %v732
        %v765 = vmul.f32 %v701, %v733
        %v766 = vadd.f32 %v670, %v734
        %v767 = vadd.f32 %v671, %v735
        %v768 = vadd.f32 %v672, %v736
        %v769 = vadd.f32 %v673, %v737
        %v770 = vadd.f32 %v674, %v738
        %v771 = vadd.f32 %v675, %v739
        %v772 = vadd.f32 %v676, %v740
        %v773 = vadd.f32 %v677, %v741
        %v774 = vadd.f32 %v678, %v742
        %v775 = vadd.f32 %v679, %v743
        %v776 = vadd.f32 %v680, %v744
        %v777 = vadd.f32 %v681, %v745
        %v778 = vadd.f32 %v682, %v746
        %v779 = vadd.f32 %v683, %v747
        %v780 = vadd.f32 %v684, %v748
        %v781 = vadd.f32 %v685, %v749
        %v782 = vadd.f32 %v686, %v750
        %v783 = vadd.f32 %v687, %v751
        %v784 = vadd.f32 %v688, %v752
        %v785 = vadd.f32 %v689, %v753
        %v786 = vadd.f32 %v690, %v754
        %v787 = vadd.f32 %v691, %v755
        %v788 = vadd.f32 %v692, %v756
        %v789 = vadd.f32 %v693, %v757
        %v790 = vadd.f32 %v694, %v758
        %v791 = vadd.f32 %v695, %v759
        %v792 = vadd.f32 %v696, %v760
        %v793 = vadd.f32 %v697, %v761
        %v794 = vadd.f32 %v698, %v762
        %v795 = vadd.f32 %v699, %v763
        %v796 = vadd.f32 %v700, %v764
        %v797 = vadd.f32 %v701, %v765
        %v798 = vld [vmem:[%s4] sm:$0x3]
        %v799 = vpack.c.bf16 %v768, %v766
        %v800 = vpack.c.bf16 %v769, %v767
        %v801 = vpack.c.bf16 %v772, %v770
        %v802 = vpack.c.bf16 %v773, %v771
        %v803 = vpack.c.bf16 %v776, %v774
        %v804 = vpack.c.bf16 %v777, %v775
        %v805 = vpack.c.bf16 %v780, %v778
        %v806 = vpack.c.bf16 %v781, %v779
        %v807 = vpack.c.bf16 %v784, %v782
        %v808 = vpack.c.bf16 %v785, %v783
        %v809 = vpack.c.bf16 %v788, %v786
        %v810 = vpack.c.bf16 %v789, %v787
        %v811 = vpack.c.bf16 %v792, %v790
        %v812 = vpack.c.bf16 %v793, %v791
        %v813 = vpack.c.bf16 %v796, %v794
        %v814 = vpack.c.bf16 %v797, %v795
        %815 = vmatprep.subr.bf16.mxu0 %v800
        %816 = vmatpush1.bf16.msra.mxu0 %v799
        %817 = vmatprep.subr.bf16.mxu0 %v802
        %818 = vmatpush1.bf16.msra.mxu0 %v801
        %819 = vmatprep.subr.bf16.mxu0 %v804
        %820 = vmatpush1.bf16.msra.mxu0 %v803
        %821 = vmatprep.subr.bf16.mxu0 %v806
        %822 = vmatpush1.bf16.msra.mxu0 %v805
        %823 = vmatprep.subr.bf16.mxu0 %v808
        %824 = vmatpush1.bf16.msra.mxu0 %v807
        %825 = vmatprep.subr.bf16.mxu0 %v810
        %826 = vmatpush1.bf16.msra.mxu0 %v809
        %827 = vmatprep.subr.bf16.mxu0 %v812
        %828 = vmatpush1.bf16.msra.mxu0 %v811
        %829 = vmatprep.subr.bf16.mxu0 %v814
        %830 = vmatpush1.bf16.msra.mxu0 %v813
        %831 = vmatprep.subr.bf16.mxu0 0
        %832 = vmatpush1.bf16.msra.mxu0 0
        %833 = vmatprep.subr.bf16.mxu0 0
        %834 = vmatpush1.bf16.msra.mxu0 0
        %835 = vmatprep.subr.bf16.mxu0 0
        %836 = vmatpush1.bf16.msra.mxu0 0
        %837 = vmatprep.subr.bf16.mxu0 0
        %838 = vmatpush1.bf16.msra.mxu0 0
        %839 = vmatprep.subr.bf16.mxu0 0
        %840 = vmatpush1.bf16.msra.mxu0 0
        %841 = vmatprep.subr.bf16.mxu0 0
        %842 = vmatpush1.bf16.msra.mxu0 0
        %843 = vmatprep.subr.bf16.mxu0 0
        %844 = vmatpush1.bf16.msra.mxu0 0
        %845 = vmatprep.subr.bf16.mxu0 0
        %846 = vmatpush1.bf16.msra.mxu0 0
        %847 = vmatprep.mubr.bf16.mxu0 0
        %848 = vmatmul.mubr.bf16.gmra.mrb[0].mxu0 %v798
        %v849 = vpop.f32.mrb[0].mxu0
        %v850 = vadd.f32 0.0, %v849
        %v851 = vpop.f32.mrb[0].mxu0
        %v852 = vadd.f32 0.0, %v851
        %v853 = vpop.f32.mrb[0].mxu0
        %v854 = vpop.f32.mrb[0].mxu0
        %855 = vdwg.mxu0
        %v856 = vunpack.c.l.bf16 %v295
        %s858 = vtos %v292
        %v859 = vstv %s858
        %v861 = vmul.f32 %v859, %v856
        %s863 = vtos %v293
        %v864 = vstv %s863
        %v866 = vmul.f32 %v864, %v850
        %v867 = vmul.f32 %v864, %v852
        %v870 = vcombine.low %v866, %v867
        %v872 = vadd.f32 %v861, %v870
        %873 = vst [vmem:[%s270] sm:$0xff] %v872
        %s874 = sand.u32 %s163, 1
        %s875 = scalar_lea.sflag [#allocation3], %s874
        %s876 = sand.u32 %s163, 1
        %s877 = smul.addr %s876, 8
        %s878 = scalar_lea.vmem [#allocation2], %s877
        // Predicated region
        $region41: #{tpu_custom_call.1} parent=39 // pred_check
          %p879 = pneg %p173
        $region42: #{tpu_custom_call.1} parent=39 // pred_check_branch
          %881 = sbr.rel (%p879) target = $region44
        $region43: #{tpu_custom_call.1} parent=39 // pred_region
          %s882 = smul.u32 2, %s24
          %s884 = ssub.s32 128, 128
          %885 = vsyncadd %s875, %s884
          %s886 = smul.addr %s23, 2
          %s887 = sadd.s32 %s882, %s886
          %s888 = smul.addr %s887, 64
          %s889 = scalar_lea.hbm %s5, %s888
          %s891 = sshll.u32 %s878, 4
          %s892 = int_to_ptr.vmem [resolvable:$true] %s891
          %894 = dma.vmem_to_hbm [thread:$0]  %s892, 128, %s889, %s875
        $region44: #{tpu_custom_call.1} parent=39 // pred_fallthru
          _
      $region40: #{tpu_custom_call.1} parent=5 // pred_fallthru
        _
      %p895 = scmp.le.s32.totalorder 2, %s14
      // Predicated region
      $region45: #{tpu_custom_call.1} parent=5 // pred_check
        %p896 = pneg %p895
      $region46: #{tpu_custom_call.1} parent=5 // pred_check_branch
        %898 = sbr.rel (%p896) target = $region48
      $region47: #{tpu_custom_call.1} parent=5 // pred_region
        %s899 = ssub.s32 %s14, 2
        // Predicated region
        $region49: #{tpu_custom_call.1} parent=47 // pred_check
          %p900 = pneg %p179
        $region50: #{tpu_custom_call.1} parent=47 // pred_check_branch
          %902 = sbr.rel (%p900) target = $region52
        $region51: #{tpu_custom_call.1} parent=47 // pred_region
          %s903 = sand.u32 %s164, 1
          %s904 = scalar_lea.sflag [#allocation3], %s903
          %s905 = sand.u32 %s164, 1
          %s906 = smul.addr %s905, 8
          %s907 = scalar_lea.vmem [#allocation2], %s906
          %908 = dma.done %s904, 128
        $region52: #{tpu_custom_call.1} parent=47 // pred_fallthru
          _
      $region48: #{tpu_custom_call.1} parent=5 // pred_fallthru
        _
    $region6: #{tpu_custom_call.1} parent=1 // loop_footer
      %s18 = sadd.s32 1, %s14
    $region7: #{tpu_custom_call.1} parent=1 // loop_footer_branch
      %13 = sbr.rel target = $region3
    $region8: #{tpu_custom_call.1} parent=1 // loop_exit
      _
    %909 = vsyncpa [#allocation3], 1
    %s910 = scalar_lea.sflag [#allocation3], 1
    %911 = vsyncpa %s910, 1

</llo_original>
